<compile_context>
chip_gen: v6e
topology: v6e:2x2x1
jax: 0.10.0
libtpu: 0.0.40
codegen_flags: <defaults>
</compile_context>

<pallas_src>
import math
import functools

import jax
import jax.numpy as jnp
from jax import lax
from jax.experimental import pallas as pl
from jax.experimental.pallas import tpu as pltpu


def _pe_dropout_kernel(seed_ref, x_ref, pe_ref, o_ref, *, p, training):
    """x_ref/o_ref block: (TB, TC);  pe_ref block: (1, TC);  seed_ref: SMEM int32[1]."""
    y = x_ref[...] + pe_ref[...]                      # broadcast add over rows

    if training and p >= 1.0:
        # torch.nn.Dropout(p=1.0) zeroes everything.
        o_ref[...] = jnp.zeros(o_ref.shape, o_ref.dtype)
    elif training and p > 0.0:
        tb, tc = x_ref.shape
        # Unique per-element counters (global row / col of this tile).
        row = (pl.program_id(1) * tb
               + lax.broadcasted_iota(jnp.int32, (tb, tc), 0)).astype(jnp.uint32)
        col = (pl.program_id(0) * tc
               + lax.broadcasted_iota(jnp.int32, (tb, tc), 1)).astype(jnp.uint32)
        seed_u = seed_ref[0].astype(jnp.uint32)

        # Counter-based hash (murmur3-style finalizer) -> uniform uint32 bits.
        h = (row * jnp.uint32(0x9E3779B1)
             + col * jnp.uint32(0x85EBCA77)
             + seed_u * jnp.uint32(0xC2B2AE3D))
        h = h ^ (h >> 16)
        h = h * jnp.uint32(0x7FEB352D)
        h = h ^ (h >> 15)
        h = h * jnp.uint32(0x846CA68B)
        h = h ^ (h >> 16)

        # Integer-threshold compare: P(drop) = p (to within 2^-32), no float convert.
        thresh = min(int(round(p * 4294967296.0)), 4294967295)
        keep = h >= jnp.uint32(thresh)

        scale = jnp.asarray(1.0 / (1.0 - p), y.dtype)
        o_ref[...] = jnp.where(keep, y * scale, jnp.zeros_like(y)).astype(o_ref.dtype)
    else:
        o_ref[...] = y.astype(o_ref.dtype)


def make_positional_encoding_table(d_model, max_len=50, dtype=jnp.float32):
    """Deterministic sinusoidal table, matching the PyTorch __init__."""
    position = jnp.arange(max_len, dtype=jnp.float32)[:, None]              # [max_len, 1]
    div_term = jnp.exp(jnp.arange(0, d_model, 2, dtype=jnp.float32)
                       * (-math.log(10000.0) / d_model))                    # [d_model/2]
    ang = position * div_term                                               # [max_len, d_model/2]
    pe = jnp.zeros((max_len, d_model), dtype=jnp.float32)
    pe = pe.at[:, 0::2].set(jnp.sin(ang))
    pe = pe.at[:, 1::2].set(jnp.cos(ang))
    return pe[None].astype(dtype)                                           # [1, max_len, d_model]


def _choose_tiles(nrows, ncols, itemsize):
    """Lane-dense tiles: last dim = full extent (or a multiple of 128), rows ~4 MiB/block."""
    MAX_TC = 8192
    tc = ncols if ncols <= MAX_TC else MAX_TC                 # full or multiple of 128
    target_elems = (4 * 1024 * 1024) // max(int(itemsize), 1)  # ~4 MiB per x block
    tr = max(1, target_elems // tc)
    if nrows <= 8 or nrows <= tr:
        tb = nrows                                            # full extent (always legal)
    else:
        tb = max(8, (min(tr, nrows) // 8) * 8)                # multiple of 8
    return tb, tc


def positional_encoding_forward(x, pe, *, p=0.1, training=True, seed=0):
    """x: [B, S, D] -> [B, S, D];  y = dropout(x + pe[:, :S, :])."""
    B, S, D = x.shape
    C = S * D
    pe_slice = pe[:, :S, :].astype(x.dtype)

    # Flatten (S, D) into one lane-dense axis; pe has period C, broadcast over B.
    x2 = x.reshape(B, C)
    pe2 = pe_slice.reshape(1, C)

    tb, tc = _choose_tiles(B, C, jnp.dtype(x.dtype).itemsize)
    # Column tiles outer, row tiles inner -> pe block index constant along the
    # inner axis, so it is fetched once per column tile, not per row tile.
    grid = (pl.cdiv(C, tc), pl.cdiv(B, tb))

    seed_arr = jnp.array([seed], dtype=jnp.int32)
    kernel = functools.partial(_pe_dropout_kernel, p=float(p), training=bool(training))

    out2 = pl.pallas_call(
        kernel,
        out_shape=jax.ShapeDtypeStruct((B, C), x.dtype),
        grid_spec=pltpu.PrefetchScalarGridSpec(
            num_scalar_prefetch=1,                                   # seed -> SMEM
            grid=grid,
            in_specs=[
                pl.BlockSpec((tb, tc), lambda c, b, seed: (b, c)),   # x tile
                pl.BlockSpec((1, tc), lambda c, b, seed: (0, c)),    # pe row (batch-broadcast)
            ],
            out_specs=pl.BlockSpec((tb, tc), lambda c, b, seed: (b, c)),
        ),
        compiler_params=pltpu.CompilerParams(
            dimension_semantics=("parallel", "parallel"),  # stateless RNG -> safe; uses both v7x TCs
            vmem_limit_bytes=48 * 1024 * 1024,             # headroom even on v7x (64 MiB VMEM)
        ),
    )(seed_arr, x2, pe2)

    return out2.reshape(B, S, D)


if __name__ == "__main__":
    B, S, D = 2, 8, 32          # batch, seq_len, embedding_dim (d_model)
    MAX_LEN = 50
    DROPOUT_P = 0.1

    key = jax.random.PRNGKey(0)
    x = jax.random.normal(key, (B, S, D), dtype=jnp.float32)

    pe = make_positional_encoding_table(D, max_len=MAX_LEN)

    # Training mode: dropout fused in-kernel (like the torch module's default).
    y = positional_encoding_forward(x, pe, p=DROPOUT_P, training=True, seed=0)
    y = jax.block_until_ready(y)

    # Eval mode (dropout == identity): y_eval must equal x + pe.
    y_eval = positional_encoding_forward(x, pe, p=DROPOUT_P, training=False)
    y_eval = jax.block_until_ready(y_eval)

    ref = x + pe[:, :S, :]
    assert y.shape == (B, S, D)
    assert jnp.allclose(y_eval, ref, atol=1e-6), "eval-mode mismatch vs x + pe"

    # Training-mode sanity: every element is either dropped (0) or ref scaled by 1/(1-p).
    scaled = ref * (1.0 / (1.0 - DROPOUT_P))
    ok = jnp.isclose(y, scaled, atol=1e-5) | jnp.isclose(y, 0.0, atol=1e-7)
    assert bool(jnp.all(ok)), "training-mode dropout values inconsistent"

    print("KERNEL_OK")
</pallas_src>

<mosaic_0001>
module attributes {stable_mosaic.version = 11 : i64} {
  func.func @_pe_dropout_kernel(%arg0: i32, %arg1: i32, %arg2: memref<1xi32, #tpu.memory_space<smem>>, %arg3: memref<2x256xf32, #tpu.memory_space<vmem>>, %arg4: memref<1x256xf32, #tpu.memory_space<vmem>>, %arg5: memref<2x256xf32, #tpu.memory_space<vmem>>) attributes {dimension_semantics = [#tpu.dimension_semantics<parallel>, #tpu.dimension_semantics<parallel>], iteration_bounds = array<i64: 1, 1>, scalar_prefetch = 1 : i64, scratch_operands = 0 : i64, tpu.core_type = #tpu.core_type<tc>, window_params = [{transform_indices = @transform_0, window_bounds = array<i64: 2, 256>}, {transform_indices = @transform_1, window_bounds = array<i64: 1, 256>}, {transform_indices = @transform_2, window_bounds = array<i64: 2, 256>}]} {
    %c0 = arith.constant 0 : index
    %c0_0 = arith.constant 0 : index
    %0 = vector.load %arg3[%c0, %c0_0] : memref<2x256xf32, #tpu.memory_space<vmem>>, vector<2x256xf32>
    %c0_1 = arith.constant 0 : index
    %c0_2 = arith.constant 0 : index
    %1 = vector.load %arg4[%c0_1, %c0_2] : memref<1x256xf32, #tpu.memory_space<vmem>>, vector<1x256xf32>
    %2 = vector.broadcast %1 : vector<1x256xf32> to vector<2x256xf32>
    %3 = arith.addf %0, %2 : vector<2x256xf32>
    %c2_i32 = arith.constant 2 : i32
    %4 = arith.muli %arg1, %c2_i32 : i32
    %5 = tpu.iota {dimensions = array<i32: 0>} : vector<2x256xi32>
    %6 = vector.broadcast %4 : i32 to vector<2x256xi32>
    %7 = arith.addi %6, %5 : vector<2x256xi32>
    %c256_i32 = arith.constant 256 : i32
    %8 = arith.muli %arg0, %c256_i32 : i32
    %9 = tpu.iota {dimensions = array<i32: 1>} : vector<2x256xi32>
    %10 = vector.broadcast %8 : i32 to vector<2x256xi32>
    %11 = arith.addi %10, %9 : vector<2x256xi32>
    %c0_3 = arith.constant 0 : index
    %12 = memref.load %arg2[%c0_3] : memref<1xi32, #tpu.memory_space<smem>>
    %c-1640531535_i32 = arith.constant -1640531535 : i32
    %13 = vector.broadcast %c-1640531535_i32 : i32 to vector<2x256xi32>
    %14 = arith.muli %7, %13 : vector<2x256xi32>
    %c-2048144777_i32 = arith.constant -2048144777 : i32
    %15 = vector.broadcast %c-2048144777_i32 : i32 to vector<2x256xi32>
    %16 = arith.muli %11, %15 : vector<2x256xi32>
    %17 = arith.addi %14, %16 : vector<2x256xi32>
    %c-1028477379_i32 = arith.constant -1028477379 : i32
    %18 = arith.muli %12, %c-1028477379_i32 : i32
    %19 = vector.broadcast %18 : i32 to vector<2x256xi32>
    %20 = arith.addi %17, %19 : vector<2x256xi32>
    %c16_i32 = arith.constant 16 : i32
    %21 = vector.broadcast %c16_i32 : i32 to vector<2x256xi32>
    %22 = arith.shrui %20, %21 : vector<2x256xi32>
    %23 = arith.xori %20, %22 : vector<2x256xi32>
    %c2146121005_i32 = arith.constant 2146121005 : i32
    %24 = vector.broadcast %c2146121005_i32 : i32 to vector<2x256xi32>
    %25 = arith.muli %23, %24 : vector<2x256xi32>
    %c15_i32 = arith.constant 15 : i32
    %26 = vector.broadcast %c15_i32 : i32 to vector<2x256xi32>
    %27 = arith.shrui %25, %26 : vector<2x256xi32>
    %28 = arith.xori %25, %27 : vector<2x256xi32>
    %c-2073254261_i32 = arith.constant -2073254261 : i32
    %29 = vector.broadcast %c-2073254261_i32 : i32 to vector<2x256xi32>
    %30 = arith.muli %28, %29 : vector<2x256xi32>
    %c16_i32_4 = arith.constant 16 : i32
    %31 = vector.broadcast %c16_i32_4 : i32 to vector<2x256xi32>
    %32 = arith.shrui %30, %31 : vector<2x256xi32>
    %33 = arith.xori %30, %32 : vector<2x256xi32>
    %c429496730_i32 = arith.constant 429496730 : i32
    %34 = vector.broadcast %c429496730_i32 : i32 to vector<2x256xi32>
    %35 = arith.cmpi uge, %33, %34 : vector<2x256xi32>
    %cst = arith.constant 1.11111116 : f32
    %36 = vector.broadcast %cst : f32 to vector<2x256xf32>
    %37 = arith.mulf %3, %36 : vector<2x256xf32>
    %cst_5 = arith.constant 0.000000e+00 : f32
    %38 = vector.broadcast %cst_5 : f32 to vector<2x256xf32>
    %39 = arith.select %35, %37, %38 : vector<2x256xi1>, vector<2x256xf32>
    %c0_6 = arith.constant 0 : index
    %c0_7 = arith.constant 0 : index
    %40 = vector.load %arg5[%c0_6, %c0_7] : memref<2x256xf32, #tpu.memory_space<vmem>>, vector<2x256xf32>
    tpu.vector_store %arg5[%c0_6, %c0_7], %39 {strides = array<i32>} : memref<2x256xf32, #tpu.memory_space<vmem>>, vector<2x256xf32>,
    return
  }
  func.func @transform_0(%arg0: i32, %arg1: i32, %arg2: memref<1xi32, #tpu.memory_space<smem>>) -> (i32, i32) {
    %c0_i32 = arith.constant 0 : i32
    return %arg1, %arg0 : i32, i32
  }
  func.func @transform_1(%arg0: i32, %arg1: i32, %arg2: memref<1xi32, #tpu.memory_space<smem>>) -> (i32, i32) {
    %c0_i32 = arith.constant 0 : i32
    %c0_i32_0 = arith.constant 0 : i32
    return %c0_i32, %arg0 : i32, i32
  }
  func.func @transform_2(%arg0: i32, %arg1: i32, %arg2: memref<1xi32, #tpu.memory_space<smem>>) -> (i32, i32) {
    %c0_i32 = arith.constant 0 : i32
    return %arg1, %arg0 : i32, i32
  }
}

</mosaic_0001>

<llo_original>
// kernel: tpu_custom_call.1
$region0: #{tpu_custom_call.1}
  #allocation0 [shape = 'u32[]', space=smem, size = 0x4, offset = 0x4, fixed_abs, tag = 'smem constant byte address 0x4 - core index']
  #allocation1 [shape = 'u32[144,128]{1,0:T(1,128)}', space=vmem, size = 0x12000, scoped, tag = 'internal scratch']
  #allocation2 [shape = 's32[1]{0}', space=sflag, size = 0x4, scoped, tag = 'scoped memory for tpu_custom_call.1']
  #allocation3 [shape = 's32[1]{0:T(128)S(6)}', space=smem, size = 0x200, scoped, tag = 'prefetched SMEM operand 0']
  %s0 = inlined_call_operand.<no memory space> [shape: s32[1], index: 0, kind: input, shape index: {}]
  %s1 = inlined_call_operand.hbm [shape: f32[2,256], index: 1, kind: input, shape index: {}]
  %s2 = inlined_call_operand.vmem [shape: f32[1,256], index: 2, kind: input, shape index: {}]
  %s3 = inlined_call_operand.hbm [shape: f32[2,256], index: 3, kind: output, shape index: {}]
  %s4 = sld [smem:[#allocation0]]
  $region22: #{tpu_custom_call.1} parent=0
    _
  %s6 = ssub.s32 1, %s4
  %s7 = scalar_select 0, %s6, %s4
  %8 = sst [smem:[#allocation3]] %s0
  $region1: #{tpu_custom_call.1} parent=0
    #allocation4 [shape = 'u8[2048]{0}', space=vmem, size = 0x800, scoped, tag = 'input window, operand 1, single buffered']
    #allocation5 [shape = 's32[1]{0}', space=sflag, size = 0x4, scoped, tag = 'scoped memory for tpu_custom_call.1']
    #allocation6 [shape = 's32[1]{0}', space=sflag, size = 0x4, scoped, tag = 'scoped memory for tpu_custom_call.1']
    #allocation7 [shape = 'u8[2048]{0}', space=vmem, size = 0x800, scoped, tag = 'output window, operand 0, single buffered']
    %9 = vsyncpa [#allocation5], 0
    %10 = vsyncpa [#allocation6], 0
    // Predicated region
    $region2: #{tpu_custom_call.1} parent=1 // pred_check
      _
    $region3: #{tpu_custom_call.1} parent=1 // pred_check_branch
      %12 = sbr.rel (0) target = $region5
    $region4: #{tpu_custom_call.1} parent=1 // pred_region
      %s14 = ssub.s32 64, 64
      %15 = vsyncadd [#allocation5], %s14
      %s17 = sshll.u32 [#allocation4], 4
      %s18 = int_to_ptr.vmem [resolvable:$true] %s17
      %20 = dma.hbm_to_vmem [thread:$0]  %s1, 64, %s18, [#allocation5]
    $region5: #{tpu_custom_call.1} parent=1 // pred_fallthru
      _
    // Predicated region
    $region6: #{tpu_custom_call.1} parent=1 // pred_check
      _
    $region7: #{tpu_custom_call.1} parent=1 // pred_check_branch
      %22 = sbr.rel (0) target = $region9
    $region8: #{tpu_custom_call.1} parent=1 // pred_region
      _
    $region9: #{tpu_custom_call.1} parent=1 // pred_fallthru
      _
    // Predicated region
    $region10: #{tpu_custom_call.1} parent=1 // pred_check
      _
    $region11: #{tpu_custom_call.1} parent=1 // pred_check_branch
      %24 = sbr.rel (0) target = $region13
    $region12: #{tpu_custom_call.1} parent=1 // pred_region
      %25 = dma.done [#allocation5], 64
    $region13: #{tpu_custom_call.1} parent=1 // pred_fallthru
      _
    %v26 = vld [vmem:[#allocation4] sm:$0xf]
    %v27 = vld [vmem:[%s2] sm:$0x3]
    %v29 = vlaneseq
    %v30 = vshrl.u32 %v29, 7
    %v31 = vsub.s32 0, %v30
    %v32 = vrot.slane %v27, %v31
    %v33 = vlaneseq
    %v34 = vshrl.u32 %v33, 7
    %v35 = vsub.s32 1, %v34
    %v36 = vrot.slane %v27, %v35
    %v37 = vcombine.low %v32, %v36
    %v39 = vunpack.c.l.s4 1983009808
    %v40 = vunpack.c.0.s8 %v39
    %v41 = vlaneseq
    %v42 = vshrl.u32 %v41, 7
    %v43 = vsub.s32 %v40, %v42
    %v44 = vrot.slane %v37, %v43
    %v46 = vadd.f32 %v26, %v44
    %s47 = smul.u32 0, 2
    %v48 = vlaneseq
    %v49 = vshrl.u32 %v48, 7
    %v50 = vstv %s47
    %v51 = vadd.s32 %v50, %v49
    %s52 = smul.u32 0, 256
    %v53 = vlaneseq
    %v54 = vand.u32 %v53, 127
    %v55 = vadd.s32 %v54, 128
    %v56 = vstv %s52
    %v57 = vadd.s32 %v56, %v54
    %v58 = vadd.s32 %v56, %v55
    %s59 = sld [smem:[#allocation3]]
    %v60 = vmul.u32 %v51, 2654435761
    %v61 = vmul.u32 %v57, 2246822519
    %v62 = vmul.u32 %v58, 2246822519
    %v63 = vadd.s32 %v60, %v61
    %v64 = vadd.s32 %v60, %v62
    %s65 = smul.u32 %s59, 3266489917
    %v66 = vstv %s65
    %v67 = vadd.s32 %v63, %v66
    %v68 = vadd.s32 %v64, %v66
    %v69 = vshrl.u32 %v67, 16
    %v70 = vshrl.u32 %v68, 16
    %v71 = vxor.u32 %v67, %v69
    %v72 = vxor.u32 %v68, %v70
    %v73 = vmul.u32 %v71, 2146121005
    %v74 = vmul.u32 %v72, 2146121005
    %v75 = vshrl.u32 %v73, 15
    %v76 = vshrl.u32 %v74, 15
    %v77 = vxor.u32 %v73, %v75
    %v78 = vxor.u32 %v74, %v76
    %v79 = vmul.u32 %v77, 2221713035
    %v80 = vmul.u32 %v78, 2221713035
    %v81 = vshrl.u32 %v79, 16
    %v82 = vshrl.u32 %v80, 16
    %v83 = vxor.u32 %v79, %v81
    %v84 = vxor.u32 %v80, %v82
    %vm85 = vcmp.ge.u32.totalorder %v83, 429496730
    %vm86 = vcmp.ge.u32.totalorder %v84, 429496730
    %v87 = vmul.f32 %v46, 1.1111112
    %v90 = vunpack.c.l.s4 1983009808
    %v91 = vunpack.c.0.s8 %v90
    %v92 = vlaneseq
    %v93 = vshrl.u32 %v92, 7
    %v94 = vsub.s32 %v91, %v93
    %v95 = vrot.slane %v87, %v94
    %v96 = vcombine.high %v95, %v95
    %v99 = vsel %vm85, %v95, 0.0
    %v100 = vsel %vm86, %v96, 0.0
    %v103 = vcombine.low %v99, %v100
    %v105 = vunpack.c.l.s4 1983009808
    %v106 = vunpack.c.0.s8 %v105
    %v107 = vlaneseq
    %v108 = vshrl.u32 %v107, 7
    %v109 = vsub.s32 %v106, %v108
    %v110 = vrot.slane %v103, %v109
    %112 = vst [vmem:[#allocation7] sm:$0xf] %v110
    // Predicated region
    $region14: #{tpu_custom_call.1} parent=1 // pred_check
      _
    $region15: #{tpu_custom_call.1} parent=1 // pred_check_branch
      %114 = sbr.rel (0) target = $region17
    $region16: #{tpu_custom_call.1} parent=1 // pred_region
      %s116 = ssub.s32 64, 64
      %117 = vsyncadd [#allocation6], %s116
      %s119 = sshll.u32 [#allocation7], 4
      %s120 = int_to_ptr.vmem [resolvable:$true] %s119
      %122 = dma.vmem_to_hbm [thread:$0]  %s120, 64, %s3, [#allocation6]
    $region17: #{tpu_custom_call.1} parent=1 // pred_fallthru
      _
    // Predicated region
    $region18: #{tpu_custom_call.1} parent=1 // pred_check
      _
    $region19: #{tpu_custom_call.1} parent=1 // pred_check_branch
      %124 = sbr.rel (0) target = $region21
    $region20: #{tpu_custom_call.1} parent=1 // pred_region
      %125 = dma.done [#allocation6], 64
    $region21: #{tpu_custom_call.1} parent=1 // pred_fallthru
      _
    %126 = vsyncpa [#allocation5], 1
    %127 = vsyncpa [#allocation6], 1

</llo_original>
